<compile_context>
chip_gen: v7x
topology: tpu7x:2x2x1
jax: 0.10.0
libtpu: 0.0.40
codegen_flags: <defaults>
</compile_context>

<pallas_src>
import functools

import jax
import jax.numpy as jnp
from jax.experimental import pallas as pl
from jax.experimental.pallas import tpu as pltpu

LANES = 128
SUBLANES = 8
SUB_ROWS = 512        # rows per in-block compute sub-chunk (~256 KiB per f32 temp)


def _tpu_config():
    """Returns (num_core_slots, max_block_rows, vmem_limit_bytes) per TPU gen."""
    try:
        kind = jax.devices()[0].device_kind.lower()
    except Exception:
        kind = ""
    if "v7" in kind:                    # 2 TCs/chip, 64 MiB VMEM, 3.2 TB/s HBM
        return 2, 4096, None
    if "v6" in kind:                    # 1 TC, 128 MiB VMEM -> big tiles are cheap
        return 1, 8192, 64 * 1024 * 1024
    if "v4" in kind or "v5p" in kind:   # megacore chips (2 TCs per device)
        return 2, 4096, 64 * 1024 * 1024
    # v5e and unknown chips: 16 MiB scoped-VMEM default, firmly HBM-bound.
    return 1, 2048, None


def _focal_combo_kernel(o_ref, t_ref, acc_ref, *,
                        alpha_pos, alpha_neg, gamma, eps,
                        array_rows, block_rows, sub_rows, steps_per_core):
    c = pl.program_id(0)     # core slot ("parallel")
    i = pl.program_id(1)     # streaming step ("arbitrary", reduction axis)

    @pl.when(i == 0)
    def _init():
        acc_ref[...] = jnp.zeros_like(acc_ref)

    # Logical (unclamped) block id; the input index_map clamps the DMA to the
    # last real block, and valid_rows <= 0 below zeroes out duplicated steps.
    blk = c * steps_per_core + i
    valid_rows = array_rows - blk * block_rows   # rows of this block inside array

    def fold(v):
        # (sub_rows, 128) -> (8, 128): layout-preserving reshape + pure VPU adds.
        return jnp.sum(v.reshape(-1, SUBLANES, LANES), axis=0)

    def chunk(ci, carry):
        facc, iacc, tacc = carry
        r0 = pl.multiple_of(ci * sub_rows, sub_rows)
        x = o_ref[pl.ds(r0, sub_rows), :].astype(jnp.float32)
        t = t_ref[pl.ds(r0, sub_rows), :].astype(jnp.float32)

        # Module semantics: the *logits* are clamped to [eps, 1-eps] before
        # BCE-with-logits / sigmoid (matches the PyTorch module), so x > 0.
        x = jnp.clip(x, eps, 1.0 - eps)
        e = jnp.exp(-x)                         # shared by softplus and sigmoid
        softplus = jnp.log1p(e)
        bce = x - x * t + softplus              # BCEWithLogits for x > 0
        p = 1.0 / (1.0 + e)                     # sigmoid(x); precise divide (header)

        is_pos = t == 1.0
        p_t = jnp.where(is_pos, p, 1.0 - p)
        focal_factor = (1.0 - p_t) ** gamma     # python int gamma -> repeated muls
        alpha = jnp.where(is_pos, alpha_pos, alpha_neg)
        focal = alpha * focal_factor * bce
        inter = p * t
        total = p + t

        # Only the sub-chunk(s) that straddle the end of the array (ragged last
        # block / clamped duplicate megacore step) pay for a mask; otherwise a
        # single scalar compare picks the identity branch.
        v = valid_rows - ci * sub_rows

        def _mask(vals):
            rid = jax.lax.broadcasted_iota(jnp.int32, (sub_rows, LANES), 0)
            ok = rid < v
            return tuple(jnp.where(ok, a, 0.0) for a in vals)   # select kills NaN garbage

        focal, inter, total = jax.lax.cond(
            v >= sub_rows, lambda vals: vals, _mask, (focal, inter, total))

        return (facc + fold(focal), iacc + fold(inter), tacc + fold(total))

    zeros = jnp.zeros((SUBLANES, LANES), jnp.float32)
    facc, iacc, tacc = jax.lax.fori_loop(0, block_rows // sub_rows, chunk,
                                         (zeros, zeros, zeros))

    acc_ref[0, 0, :, :] += facc
    acc_ref[0, 1, :, :] += iacc
    acc_ref[0, 2, :, :] += tacc


def focal_combo_loss(outputs, targets, *, alpha_pos=0.75, alpha_neg=0.25,
                     gamma=4, reduction="mean", weights=None,
                     dice_weight=0.5, eps=1e-6):
    # TODO(synk): `weights` (class re-weighting) and reduction='none' are not
    # implemented; the module defaults use weights=None and reduction='mean'.
    assert weights is None

    n = outputs.size
    o_flat = outputs.reshape(-1)
    t_flat = targets.reshape(-1)
    # bf16 is streamed natively (halves HBM bytes for this HBM-bound kernel);
    # callers should hand over bf16/f32 at the boundary.  Other dtypes fall
    # back to an f32 cast (its own HBM pass, unavoidable without a contract).
    if o_flat.dtype not in (jnp.bfloat16, jnp.float32):
        o_flat = o_flat.astype(jnp.float32)
    if t_flat.dtype not in (jnp.bfloat16, jnp.float32):
        t_flat = t_flat.astype(jnp.float32)

    num_cores, max_block_rows, vmem_limit = _tpu_config()

    # 2-D lane-dense view.  Common case (n % 128 == 0, n >= 16*128): free
    # reshape, zero extra HBM traffic.  Rare case: pad with zeros only up to
    # the next lane / minimum-tile boundary (never to a block multiple) and
    # remove the pad contribution in closed form below.
    rows = max(pl.cdiv(n, LANES), 2 * SUBLANES)
    pad0 = rows * LANES - n
    if pad0:
        o_flat = jnp.pad(o_flat, (0, pad0))
        t_flat = jnp.pad(t_flat, (0, pad0))
    o2 = o_flat.reshape(rows, LANES)
    t2 = t_flat.reshape(rows, LANES)

    # Block rows: multiple of 16 (covers f32 (8,128) and bf16 (16,128) tiling)
    # and never larger than the array; the ragged last block is masked in-kernel.
    block_rows = min(max_block_rows, (rows // 16) * 16)
    if block_rows > SUB_ROWS:
        block_rows -= block_rows % SUB_ROWS
    sub_rows = min(SUB_ROWS, block_rows)

    num_blocks = pl.cdiv(rows, block_rows)
    num_cores = max(1, min(num_cores, num_blocks))
    steps_per_core = pl.cdiv(num_blocks, num_cores)
    last_blk = num_blocks - 1

    kernel = functools.partial(
        _focal_combo_kernel,
        alpha_pos=float(alpha_pos), alpha_neg=float(alpha_neg),
        gamma=int(gamma) if float(gamma).is_integer() else float(gamma),
        eps=float(eps),
        array_rows=int(rows), block_rows=int(block_rows),
        sub_rows=int(sub_rows), steps_per_core=int(steps_per_core))

    in_spec = pl.BlockSpec(
        (block_rows, LANES),
        # Clamp so duplicated megacore steps re-read an in-bounds block; the
        # kernel zeroes their contribution (valid_rows <= 0 there).
        lambda c, i: (jnp.minimum(c * steps_per_core + i, last_blk), 0))
    out_spec = pl.BlockSpec((1, 3, SUBLANES, LANES), lambda c, i: (c, 0, 0, 0))

    # TODO(synk): on v7x, confirm with xprof that the "parallel" axis really
    # shards across both TensorCores; switch to CORE_PARALLEL if it does not.
    cp_kwargs = dict(dimension_semantics=("parallel", "arbitrary"))
    if vmem_limit is not None:
        cp_kwargs["vmem_limit_bytes"] = int(vmem_limit)

    acc = pl.pallas_call(
        kernel,
        out_shape=jax.ShapeDtypeStruct((num_cores, 3, SUBLANES, LANES),
                                       jnp.float32),
        grid_spec=pltpu.PrefetchScalarGridSpec(
            num_scalar_prefetch=0,
            grid=(num_cores, steps_per_core),
            in_specs=[in_spec, in_spec],
            out_specs=out_spec),
        compiler_params=pltpu.CompilerParams(**cp_kwargs),
    )(o2, t2)

    sums = jnp.sum(acc, axis=(0, 2, 3))      # tiny: (cores, 3, 8, 128) -> (3,)
    fsum, isum, tsum = sums[0], sums[1], sums[2]

    if pad0:
        # Closed-form contribution of a zero pad element (o=0 -> x=eps, t=0);
        # its `inter` contribution is exactly zero.
        x0 = jnp.float32(eps)
        e0 = jnp.exp(-x0)
        p0 = 1.0 / (1.0 + e0)
        g = int(gamma) if float(gamma).is_integer() else float(gamma)
        focal0 = jnp.float32(alpha_neg) * p0 ** g * (x0 + jnp.log1p(e0))
        fsum = fsum - pad0 * focal0
        tsum = tsum - pad0 * p0

    smooth = 1e-6
    dice_score = (2.0 * isum + smooth) / (tsum + smooth)
    dice_loss = 1.0 - dice_score

    # combined = dice_weight * focal (elementwise) + (1 - dice_weight) * dice (scalar)
    if reduction == "mean":
        return dice_weight * (fsum / n) + (1.0 - dice_weight) * dice_loss
    elif reduction == "sum":
        return dice_weight * fsum + (1.0 - dice_weight) * dice_loss * n
    else:
        raise NotImplementedError("only 'mean' and 'sum' reductions supported")


def _reference(outputs, targets, *, alpha_pos=0.75, alpha_neg=0.25, gamma=4,
               dice_weight=0.5, eps=1e-6):
    x = jnp.clip(outputs.astype(jnp.float32), eps, 1.0 - eps)
    t = targets.astype(jnp.float32)
    bce = jnp.maximum(x, 0.0) - x * t + jnp.log1p(jnp.exp(-jnp.abs(x)))
    p = jax.nn.sigmoid(x)
    p_t = jnp.where(t == 1.0, p, 1.0 - p)
    focal = jnp.where(t == 1.0, alpha_pos, alpha_neg) * (1.0 - p_t) ** gamma * bce
    smooth = 1e-6
    inter = jnp.sum(p * t)
    total = jnp.sum(p + t)
    dice_loss = 1.0 - (2.0 * inter + smooth) / (total + smooth)
    return jnp.mean(dice_weight * focal + (1.0 - dice_weight) * dice_loss)


if __name__ == "__main__":
    key = jax.random.PRNGKey(0)
    k1, k2 = jax.random.split(key)
    # small shapes consistent with a segmentation-style heatmap loss (NCHW)
    x = jax.random.normal(k1, (2, 4, 16, 16), dtype=jnp.float32)
    t = (jax.random.uniform(k2, (2, 4, 16, 16)) > 0.8).astype(jnp.float32)

    loss = focal_combo_loss(x, t)
    loss = jax.block_until_ready(loss)

    ref = _reference(x, t)
    assert jnp.allclose(loss, ref, rtol=1e-5, atol=1e-6), (loss, ref)
    print("KERNEL_OK")
</pallas_src>

<mosaic_0001>
module attributes {stable_mosaic.version = 11 : i64} {
  func.func @_focal_combo_kernel(%arg0: i32, %arg1: i32, %arg2: memref<16x128xf32, #tpu.memory_space<vmem>>, %arg3: memref<16x128xf32, #tpu.memory_space<vmem>>, %arg4: memref<1x3x8x128xf32, #tpu.memory_space<vmem>>) attributes {dimension_semantics = [#tpu.dimension_semantics<parallel>, #tpu.dimension_semantics<arbitrary>], iteration_bounds = array<i64: 1, 1>, scalar_prefetch = 0 : i64, scratch_operands = 0 : i64, tpu.core_type = #tpu.core_type<tc>, window_params = [{transform_indices = @transform_0, window_bounds = array<i64: 16, 128>}, {transform_indices = @transform_1, window_bounds = array<i64: 16, 128>}, {transform_indices = @transform_2, window_bounds = array<i64: 1, 3, 8, 128>}]} {
    %c0_i32 = arith.constant 0 : i32
    %0 = arith.cmpi eq, %arg1, %c0_i32 : i32
    %1 = arith.extui %0 : i1 to i32
    %c0_i32_0 = arith.constant 0 : i32
    %2 = arith.cmpi ne, %1, %c0_i32_0 : i32
    scf.if %2 {
      %cst_44 = arith.constant 0.000000e+00 : f32
      %78 = vector.broadcast %cst_44 : f32 to vector<1x3x8x128xf32>
      %c0_45 = arith.constant 0 : index
      %c0_46 = arith.constant 0 : index
      %c0_47 = arith.constant 0 : index
      %c0_48 = arith.constant 0 : index
      %79 = vector.load %arg4[%c0_45, %c0_46, %c0_47, %c0_48] : memref<1x3x8x128xf32, #tpu.memory_space<vmem>>, vector<1x3x8x128xf32>
      tpu.vector_store %arg4[%c0_45, %c0_46, %c0_47, %c0_48], %78 {strides = array<i32>} : memref<1x3x8x128xf32, #tpu.memory_space<vmem>>, vector<1x3x8x128xf32>,
    } else {
    }
    %c1_i32 = arith.constant 1 : i32
    %3 = arith.muli %arg0, %c1_i32 : i32
    %4 = arith.addi %3, %arg1 : i32
    %c16_i32 = arith.constant 16 : i32
    %5 = arith.muli %4, %c16_i32 : i32
    %c16_i32_1 = arith.constant 16 : i32
    %6 = arith.subi %c16_i32_1, %5 : i32
    %cst = arith.constant 0.000000e+00 : f32
    %7 = vector.broadcast %cst : f32 to vector<8x128xf32>
    %c0_i32_2 = arith.constant 0 : i32
    %c16_i32_3 = arith.constant 16 : i32
    %8 = arith.muli %c0_i32_2, %c16_i32_3 : i32
    %9 = tpu.assume_multiple %8, 16 : i32
    %10 = arith.index_cast %9 : i32 to index
    %c0 = arith.constant 0 : index
    %11 = vector.load %arg2[%10, %c0] : memref<16x128xf32, #tpu.memory_space<vmem>>, vector<16x128xf32>
    %12 = arith.index_cast %9 : i32 to index
    %c0_4 = arith.constant 0 : index
    %13 = vector.load %arg3[%12, %c0_4] : memref<16x128xf32, #tpu.memory_space<vmem>>, vector<16x128xf32>
    %cst_5 = arith.constant 9.99999997E-7 : f32
    %cst_6 = arith.constant 0.999998986 : f32
    %14 = vector.broadcast %cst_5 : f32 to vector<16x128xf32>
    %15 = arith.maximumf %14, %11 : vector<16x128xf32>
    %16 = vector.broadcast %cst_6 : f32 to vector<16x128xf32>
    %17 = arith.minimumf %16, %15 : vector<16x128xf32>
    %cst_7 = arith.constant 0.000000e+00 : f32
    %18 = vector.broadcast %cst_7 : f32 to vector<16x128xf32>
    %19 = arith.subf %18, %17 : vector<16x128xf32>
    %20 = math.exp %19 : vector<16x128xf32>
    %21 = math.log1p %20 : vector<16x128xf32>
    %22 = arith.mulf %17, %13 : vector<16x128xf32>
    %23 = arith.subf %17, %22 : vector<16x128xf32>
    %24 = arith.addf %23, %21 : vector<16x128xf32>
    %cst_8 = arith.constant 1.000000e+00 : f32
    %25 = vector.broadcast %cst_8 : f32 to vector<16x128xf32>
    %26 = arith.addf %25, %20 : vector<16x128xf32>
    %cst_9 = arith.constant 1.000000e+00 : f32
    %27 = vector.broadcast %cst_9 : f32 to vector<16x128xf32>
    %28 = arith.divf %27, %26 : vector<16x128xf32>
    %cst_10 = arith.constant 1.000000e+00 : f32
    %29 = vector.broadcast %cst_10 : f32 to vector<16x128xf32>
    %30 = arith.cmpf oeq, %13, %29 : vector<16x128xf32>
    %cst_11 = arith.constant 1.000000e+00 : f32
    %31 = vector.broadcast %cst_11 : f32 to vector<16x128xf32>
    %32 = arith.subf %31, %28 : vector<16x128xf32>
    %33 = arith.select %30, %28, %32 : vector<16x128xi1>, vector<16x128xf32>
    %cst_12 = arith.constant 1.000000e+00 : f32
    %34 = vector.broadcast %cst_12 : f32 to vector<16x128xf32>
    %35 = arith.subf %34, %33 : vector<16x128xf32>
    %36 = arith.mulf %35, %35 : vector<16x128xf32>
    %37 = arith.mulf %36, %36 : vector<16x128xf32>
    %cst_13 = arith.constant 7.500000e-01 : f32
    %cst_14 = arith.constant 2.500000e-01 : f32
    %38 = vector.broadcast %cst_13 : f32 to vector<16x128xf32>
    %39 = vector.broadcast %cst_14 : f32 to vector<16x128xf32>
    %40 = arith.select %30, %38, %39 : vector<16x128xi1>, vector<16x128xf32>
    %41 = arith.mulf %40, %37 : vector<16x128xf32>
    %42 = arith.mulf %41, %24 : vector<16x128xf32>
    %43 = arith.mulf %28, %13 : vector<16x128xf32>
    %44 = arith.addf %28, %13 : vector<16x128xf32>
    %c16_i32_15 = arith.constant 16 : i32
    %45 = arith.muli %c0_i32_2, %c16_i32_15 : i32
    %46 = arith.subi %6, %45 : i32
    %c16_i32_16 = arith.constant 16 : i32
    %47 = arith.cmpi sge, %46, %c16_i32_16 : i32
    %48 = arith.extui %47 : i1 to i32
    %c0_i32_17 = arith.constant 0 : i32
    %49 = arith.cmpi ne, %48, %c0_i32_17 : i32
    %50:3 = scf.if %49 -> (vector<16x128xf32>, vector<16x128xf32>, vector<16x128xf32>) {
      scf.yield %42, %43, %44 : vector<16x128xf32>, vector<16x128xf32>, vector<16x128xf32>
    } else {
      %78 = tpu.iota {dimensions = array<i32: 0>} : vector<16x128xi32>
      %79 = vector.broadcast %46 : i32 to vector<16x128xi32>
      %80 = arith.cmpi slt, %78, %79 : vector<16x128xi32>
      %cst_44 = arith.constant 0.000000e+00 : f32
      %81 = vector.broadcast %cst_44 : f32 to vector<16x128xf32>
      %82 = arith.select %80, %42, %81 : vector<16x128xi1>, vector<16x128xf32>
      %cst_45 = arith.constant 0.000000e+00 : f32
      %83 = vector.broadcast %cst_45 : f32 to vector<16x128xf32>
      %84 = arith.select %80, %43, %83 : vector<16x128xi1>, vector<16x128xf32>
      %cst_46 = arith.constant 0.000000e+00 : f32
      %85 = vector.broadcast %cst_46 : f32 to vector<16x128xf32>
      %86 = arith.select %80, %44, %85 : vector<16x128xi1>, vector<16x128xf32>
      scf.yield %82, %84, %86 : vector<16x128xf32>, vector<16x128xf32>, vector<16x128xf32>
    }
    %51 = vector.shape_cast %50#0 : vector<16x128xf32> to vector<2x8x128xf32>
    %cst_18 = arith.constant dense<0.000000e+00> : vector<8x128xf32>
    %52 = vector.multi_reduction <add>, %51, %cst_18 [0] : vector<2x8x128xf32> to vector<8x128xf32>
    %53 = arith.addf %7, %52 : vector<8x128xf32>
    %54 = vector.shape_cast %50#1 : vector<16x128xf32> to vector<2x8x128xf32>
    %cst_19 = arith.constant dense<0.000000e+00> : vector<8x128xf32>
    %55 = vector.multi_reduction <add>, %54, %cst_19 [0] : vector<2x8x128xf32> to vector<8x128xf32>
    %56 = arith.addf %7, %55 : vector<8x128xf32>
    %57 = vector.shape_cast %50#2 : vector<16x128xf32> to vector<2x8x128xf32>
    %cst_20 = arith.constant dense<0.000000e+00> : vector<8x128xf32>
    %58 = vector.multi_reduction <add>, %57, %cst_20 [0] : vector<2x8x128xf32> to vector<8x128xf32>
    %59 = arith.addf %7, %58 : vector<8x128xf32>
    %c1_i32_21 = arith.constant 1 : i32
    %c0_22 = arith.constant 0 : index
    %c0_23 = arith.constant 0 : index
    %c0_24 = arith.constant 0 : index
    %c0_25 = arith.constant 0 : index
    %60 = vector.load %arg4[%c0_22, %c0_23, %c0_24, %c0_25] : memref<1x3x8x128xf32, #tpu.memory_space<vmem>>, vector<1x1x8x128xf32>
    %61 = vector.shape_cast %60 : vector<1x1x8x128xf32> to vector<8x128xf32>
    %62 = arith.addf %61, %53 : vector<8x128xf32>
    %c0_26 = arith.constant 0 : index
    %c0_27 = arith.constant 0 : index
    %c0_28 = arith.constant 0 : index
    %c0_29 = arith.constant 0 : index
    %63 = vector.load %arg4[%c0_26, %c0_27, %c0_28, %c0_29] : memref<1x3x8x128xf32, #tpu.memory_space<vmem>>, vector<1x1x8x128xf32>
    %64 = vector.shape_cast %63 : vector<1x1x8x128xf32> to vector<8x128xf32>
    %65 = vector.shape_cast %62 : vector<8x128xf32> to vector<1x1x8x128xf32>
    tpu.vector_store %arg4[%c0_26, %c0_27, %c0_28, %c0_29], %65 {strides = array<i32>} : memref<1x3x8x128xf32, #tpu.memory_space<vmem>>, vector<1x1x8x128xf32>,
    %c0_30 = arith.constant 0 : index
    %c1 = arith.constant 1 : index
    %c0_31 = arith.constant 0 : index
    %c0_32 = arith.constant 0 : index
    %66 = vector.load %arg4[%c0_30, %c1, %c0_31, %c0_32] : memref<1x3x8x128xf32, #tpu.memory_space<vmem>>, vector<1x1x8x128xf32>
    %67 = vector.shape_cast %66 : vector<1x1x8x128xf32> to vector<8x128xf32>
    %68 = arith.addf %67, %56 : vector<8x128xf32>
    %c0_33 = arith.constant 0 : index
    %c1_34 = arith.constant 1 : index
    %c0_35 = arith.constant 0 : index
    %c0_36 = arith.constant 0 : index
    %69 = vector.load %arg4[%c0_33, %c1_34, %c0_35, %c0_36] : memref<1x3x8x128xf32, #tpu.memory_space<vmem>>, vector<1x1x8x128xf32>
    %70 = vector.shape_cast %69 : vector<1x1x8x128xf32> to vector<8x128xf32>
    %71 = vector.shape_cast %68 : vector<8x128xf32> to vector<1x1x8x128xf32>
    tpu.vector_store %arg4[%c0_33, %c1_34, %c0_35, %c0_36], %71 {strides = array<i32>} : memref<1x3x8x128xf32, #tpu.memory_space<vmem>>, vector<1x1x8x128xf32>,
    %c0_37 = arith.constant 0 : index
    %c2 = arith.constant 2 : index
    %c0_38 = arith.constant 0 : index
    %c0_39 = arith.constant 0 : index
    %72 = vector.load %arg4[%c0_37, %c2, %c0_38, %c0_39] : memref<1x3x8x128xf32, #tpu.memory_space<vmem>>, vector<1x1x8x128xf32>
    %73 = vector.shape_cast %72 : vector<1x1x8x128xf32> to vector<8x128xf32>
    %74 = arith.addf %73, %59 : vector<8x128xf32>
    %c0_40 = arith.constant 0 : index
    %c2_41 = arith.constant 2 : index
    %c0_42 = arith.constant 0 : index
    %c0_43 = arith.constant 0 : index
    %75 = vector.load %arg4[%c0_40, %c2_41, %c0_42, %c0_43] : memref<1x3x8x128xf32, #tpu.memory_space<vmem>>, vector<1x1x8x128xf32>
    %76 = vector.shape_cast %75 : vector<1x1x8x128xf32> to vector<8x128xf32>
    %77 = vector.shape_cast %74 : vector<8x128xf32> to vector<1x1x8x128xf32>
    tpu.vector_store %arg4[%c0_40, %c2_41, %c0_42, %c0_43], %77 {strides = array<i32>} : memref<1x3x8x128xf32, #tpu.memory_space<vmem>>, vector<1x1x8x128xf32>,
    return
  }
  func.func @transform_0(%arg0: i32, %arg1: i32) -> (i32, i32) {
    %c1_i32 = arith.constant 1 : i32
    %0 = arith.muli %arg0, %c1_i32 : i32
    %1 = arith.addi %0, %arg1 : i32
    %c0_i32 = arith.constant 0 : i32
    %2 = arith.minsi %1, %c0_i32 : i32
    %c0_i32_0 = arith.constant 0 : i32
    %c0_i32_1 = arith.constant 0 : i32
    return %2, %c0_i32_0 : i32, i32
  }
  func.func @transform_1(%arg0: i32, %arg1: i32) -> (i32, i32) {
    %c1_i32 = arith.constant 1 : i32
    %0 = arith.muli %arg0, %c1_i32 : i32
    %1 = arith.addi %0, %arg1 : i32
    %c0_i32 = arith.constant 0 : i32
    %2 = arith.minsi %1, %c0_i32 : i32
    %c0_i32_0 = arith.constant 0 : i32
    %c0_i32_1 = arith.constant 0 : i32
    return %2, %c0_i32_0 : i32, i32
  }
  func.func @transform_2(%arg0: i32, %arg1: i32) -> (i32, i32, i32, i32) {
    %c0_i32 = arith.constant 0 : i32
    %c0_i32_0 = arith.constant 0 : i32
    %c0_i32_1 = arith.constant 0 : i32
    %c0_i32_2 = arith.constant 0 : i32
    return %arg0, %c0_i32, %c0_i32_0, %c0_i32_1 : i32, i32, i32, i32
  }
}

</mosaic_0001>

<llo_original>
// kernel: tpu_custom_call.1
$region0: #{tpu_custom_call.1}
  #allocation0 [shape = 'u32[]', space=smem, size = 0x4, offset = 0x4, fixed_abs, tag = 'smem constant byte address 0x4 - core index']
  #allocation1 [shape = 'u32[144,128]{1,0:T(1,128)}', space=vmem, size = 0x12000, scoped, tag = 'internal scratch']
  %s0 = inlined_call_operand.hbm [shape: f32[16,128], index: 0, kind: input, shape index: {}]
  %s1 = inlined_call_operand.hbm [shape: f32[16,128], index: 1, kind: input, shape index: {}]
  %s2 = inlined_call_operand.hbm [shape: f32[1,3,8,128], index: 2, kind: output, shape index: {}]
  %s3 = sld [smem:[#allocation0]]
  $region38: #{tpu_custom_call.1} parent=0
    _
  %s5 = ssub.s32 1, %s3
  %s6 = scalar_select 0, %s5, %s3
  $region1: #{tpu_custom_call.1} parent=0
    #allocation2 [shape = 'u8[8192]{0}', space=vmem, size = 0x2000, scoped, tag = 'input window, operand 0, single buffered']
    #allocation3 [shape = 's32[1]{0}', space=sflag, size = 0x4, scoped, tag = 'scoped memory for tpu_custom_call.1']
    #allocation4 [shape = 's32[1]{0}', space=sflag, size = 0x4, scoped, tag = 'scoped memory for tpu_custom_call.1']
    #allocation5 [shape = 'u8[8192]{0}', space=vmem, size = 0x2000, scoped, tag = 'input window, operand 1, single buffered']
    #allocation6 [shape = 's32[1]{0}', space=sflag, size = 0x4, scoped, tag = 'scoped memory for tpu_custom_call.1']
    #allocation7 [shape = 'u8[12288]{0}', space=vmem, size = 0x3000, scoped, tag = 'output window, operand 0, single buffered']
    %7 = vsyncpa [#allocation3], 0
    %8 = vsyncpa [#allocation6], 0
    %9 = vsyncpa [#allocation4], 0
    // Predicated region
    $region2: #{tpu_custom_call.1} parent=1 // pred_check
      _
    $region3: #{tpu_custom_call.1} parent=1 // pred_check_branch
      %11 = sbr.rel (0) target = $region5
    $region4: #{tpu_custom_call.1} parent=1 // pred_region
      %s12 = sadd.s32 0, 0
      %p13 = scmp.lt.s32.totalorder %s12, 0
      %s14 = scalar_select %p13, %s12, 0
      %s15 = smul.u32 2, %s14
      %s17 = ssub.s32 256, 256
      %18 = vsyncadd [#allocation3], %s17
      %s19 = smul.addr %s15, 128
      %s20 = scalar_lea.hbm %s0, %s19
      %s21 = sshll.u32 [#allocation2], 4
      %s22 = int_to_ptr.vmem [resolvable:$true] %s21
      %27 = dma.hbm_to_vmem [thread:$0]  %s20, 256, %s22, [#allocation3], 128, 128, 8
    $region5: #{tpu_custom_call.1} parent=1 // pred_fallthru
      _
    // Predicated region
    $region6: #{tpu_custom_call.1} parent=1 // pred_check
      _
    $region7: #{tpu_custom_call.1} parent=1 // pred_check_branch
      %29 = sbr.rel (0) target = $region9
    $region8: #{tpu_custom_call.1} parent=1 // pred_region
      %s30 = sadd.s32 0, 0
      %p31 = scmp.lt.s32.totalorder %s30, 0
      %s32 = scalar_select %p31, %s30, 0
      %s33 = smul.u32 2, %s32
      %s35 = ssub.s32 256, 256
      %36 = vsyncadd [#allocation6], %s35
      %s37 = smul.addr %s33, 128
      %s38 = scalar_lea.hbm %s1, %s37
      %s39 = sshll.u32 [#allocation5], 4
      %s40 = int_to_ptr.vmem [resolvable:$true] %s39
      %45 = dma.hbm_to_vmem [thread:$0]  %s38, 256, %s40, [#allocation6], 128, 128, 8
    $region9: #{tpu_custom_call.1} parent=1 // pred_fallthru
      _
    // Predicated region
    $region10: #{tpu_custom_call.1} parent=1 // pred_check
      _
    $region11: #{tpu_custom_call.1} parent=1 // pred_check_branch
      %47 = sbr.rel (0) target = $region13
    $region12: #{tpu_custom_call.1} parent=1 // pred_region
      %48 = dma.done [#allocation3], 256
    $region13: #{tpu_custom_call.1} parent=1 // pred_fallthru
      _
    // Predicated region
    $region14: #{tpu_custom_call.1} parent=1 // pred_check
      _
    $region15: #{tpu_custom_call.1} parent=1 // pred_check_branch
      %50 = sbr.rel (0) target = $region17
    $region16: #{tpu_custom_call.1} parent=1 // pred_region
      %51 = dma.done [#allocation6], 256
    $region17: #{tpu_custom_call.1} parent=1 // pred_fallthru
      _
    %s52 = sadd.s32 0, 0
    %p53 = scmp.lt.s32.totalorder %s52, 0
    %s54 = scalar_select %p53, %s52, 0
    %s55 = smul.u32 2, %s54
    %s56 = sadd.s32 0, 0
    %p57 = scmp.lt.s32.totalorder %s56, 0
    %s58 = scalar_select %p57, %s56, 0
    %s59 = smul.u32 2, %s58
    %p60 = scmp.eq.s32.totalorder 0, 0
    // Predicated region
    $region18: #{tpu_custom_call.1} parent=1 // pred_check
      %p61 = pneg %p60
    $region19: #{tpu_custom_call.1} parent=1 // pred_check_branch
      %63 = sbr.rel (%p61) target = $region21
    $region20: #{tpu_custom_call.1} parent=1 // pred_region
      %64 = vst [vmem:[#allocation7] sm:$0xff] 0.0
      %65 = vst [vmem:[#allocation7 + $0x8] sm:$0xff] 0.0
      %66 = vst [vmem:[#allocation7 + $0x10] sm:$0xff] 0.0
    $region21: #{tpu_custom_call.1} parent=1 // pred_fallthru
      _
    %s67 = sadd.s32 0, 0
    %s68 = smul.u32 %s67, 16
    %s69 = ssub.s32 16, %s68
    %v70 = vld [vmem:[#allocation2] sm:$0xff]
    %v71 = vld [vmem:[#allocation2 + $0x8] sm:$0xff]
    %v72 = vld [vmem:[#allocation5] sm:$0xff]
    %v73 = vld [vmem:[#allocation5 + $0x8] sm:$0xff]
    %v74 = vmax.f32 %v70, 1e-06
    %v75 = vmax.f32 %v71, 1e-06
    %v76 = vmin.f32 %v74, 0.999999
    %v77 = vmin.f32 %v75, 0.999999
    %v78 = vsub.f32 0.0, %v76
    %v79 = vsub.f32 0.0, %v77
    %v80 = vmul.f32 %v78, 1.442695
    %v81 = vpow.pop %v80
    %v82 = vmul.f32 %v79, 1.442695
    %v83 = vpow.pop %v82
    %v84 = vadd.f32 %v81, 1.0
    %v85 = vlog2.pop %v84
    %v86 = vmul.f32 %v85, 0.6931472
    %v87 = vmul.f32 -0.5, %v81
    %v88 = vadd.f32 %v87, 1.0
    %v89 = vmul.f32 %v88, %v81
    %v90 = vand.u32 2147483647, %v81
    %vm91 = vcmp.lt.f32.partialorder %v90, 0.0004427343
    %v92 = vsel %vm91, %v89, %v86
    %v93 = vadd.f32 %v83, 1.0
    %v94 = vlog2.pop %v93
    %v95 = vmul.f32 %v94, 0.6931472
    %v96 = vmul.f32 -0.5, %v83
    %v97 = vadd.f32 %v96, 1.0
    %v98 = vmul.f32 %v97, %v83
    %v99 = vand.u32 2147483647, %v83
    %vm100 = vcmp.lt.f32.partialorder %v99, 0.0004427343
    %v101 = vsel %vm100, %v98, %v95
    %v102 = vmul.f32 %v76, %v72
    %v103 = vmul.f32 %v77, %v73
    %v104 = vsub.f32 %v76, %v102
    %v105 = vsub.f32 %v77, %v103
    %v106 = vadd.f32 %v104, %v92
    %v107 = vadd.f32 %v105, %v101
    %v108 = vadd.f32 %v81, 1.0
    %v109 = vadd.f32 %v83, 1.0
    %v110 = vrcp.pop %v108
    %v111 = vmul.f32 1.0, %v110
    %v112 = vrcp.pop %v109
    %v113 = vmul.f32 1.0, %v112
    %vm114 = vcmp.eq.f32.partialorder %v72, 1.0
    %vm115 = vcmp.eq.f32.partialorder %v73, 1.0
    %v116 = vsub.f32 1.0, %v111
    %v117 = vsub.f32 1.0, %v113
    %v118 = vsel %vm114, %v111, %v116
    %v119 = vsel %vm115, %v113, %v117
    %v120 = vsub.f32 1.0, %v118
    %v121 = vsub.f32 1.0, %v119
    %v122 = vmul.f32 %v120, %v120
    %v123 = vmul.f32 %v121, %v121
    %v124 = vmul.f32 %v122, %v122
    %v125 = vmul.f32 %v123, %v123
    %v126 = vsel %vm114, 0.75, 0.25
    %v127 = vsel %vm115, 0.75, 0.25
    %v128 = vmul.f32 %v126, %v124
    %v129 = vmul.f32 %v127, %v125
    %v130 = vmul.f32 %v128, %v106
    %v131 = vmul.f32 %v129, %v107
    %v132 = vmul.f32 %v111, %v72
    %v133 = vmul.f32 %v113, %v73
    %v134 = vadd.f32 %v111, %v72
    %v135 = vadd.f32 %v113, %v73
    %p136 = scmp.ge.s32.totalorder %s69, 16
    // Predicated region
    $region22: #{tpu_custom_call.1} parent=1 // pred_check
      %p137 = pneg %p136
    $region23: #{tpu_custom_call.1} parent=1 // pred_check_branch
      %139 = sbr.rel (%p137) target = $region25
    $region24: #{tpu_custom_call.1} parent=1 // pred_region
      _
    $region25: #{tpu_custom_call.1} parent=1 // pred_fallthru
      _
    %p140 = pneg %p136
    // Predicated region
    $region26: #{tpu_custom_call.1} parent=1 // pred_check
      _
    $region27: #{tpu_custom_call.1} parent=1 // pred_check_branch
      %142 = sbr.rel (%p136) target = $region29
    $region28: #{tpu_custom_call.1} parent=1 // pred_region
      %v143 = vlaneseq
      %v144 = vshrl.u32 %v143, 7
      %v145 = vadd.s32 %v144, 8
      %v146 = vstv %s69
      %vm147 = vcmp.lt.s32.totalorder %v144, %v146
      %vm148 = vcmp.lt.s32.totalorder %v145, %v146
      %v149 = vsel %vm147, %v130, 0.0
      %v150 = vsel %vm148, %v131, 0.0
      %v151 = vsel %vm147, %v132, 0.0
      %v152 = vsel %vm148, %v133, 0.0
      %v153 = vsel %vm147, %v134, 0.0
      %v154 = vsel %vm148, %v135, 0.0
    $region29: #{tpu_custom_call.1} parent=1 // pred_fallthru
      %v155 = vphi %v130, %v149
      %v156 = vphi %v131, %v150
      %v157 = vphi %v132, %v151
      %v158 = vphi %v133, %v152
      %v159 = vphi %v134, %v153
      %v160 = vphi %v135, %v154
    %v161 = vadd.f32 %v155, %v156
    %v162 = vadd.f32 %v161, 0.0
    %v163 = vadd.f32 %v157, %v158
    %v164 = vadd.f32 %v163, 0.0
    %v165 = vadd.f32 %v159, %v160
    %v166 = vadd.f32 %v165, 0.0
    %v167 = vld [vmem:[#allocation7] sm:$0xff]
    %v168 = vadd.f32 %v167, %v162
    %169 = vst [vmem:[#allocation7] sm:$0xff] %v168
    %s170 = scalar_lea.vmem [#allocation7], 8
    %v171 = vld [vmem:[%s170] sm:$0xff]
    %v172 = vadd.f32 %v171, %v164
    %173 = vst [vmem:[%s170] sm:$0xff] %v172
    %s174 = scalar_lea.vmem [#allocation7], 16
    %v175 = vld [vmem:[%s174] sm:$0xff]
    %v176 = vadd.f32 %v175, %v166
    %177 = vst [vmem:[%s174] sm:$0xff] %v176
    // Predicated region
    $region30: #{tpu_custom_call.1} parent=1 // pred_check
      _
    $region31: #{tpu_custom_call.1} parent=1 // pred_check_branch
      %179 = sbr.rel (0) target = $region33
    $region32: #{tpu_custom_call.1} parent=1 // pred_region
      %s181 = ssub.s32 384, 384
      %182 = vsyncadd [#allocation4], %s181
      %s183 = sshll.u32 [#allocation7], 4
      %s184 = int_to_ptr.vmem [resolvable:$true] %s183
      %189 = dma.vmem_to_hbm [thread:$0]  %s184, 384, %s2, [#allocation4], 128, 128, 8
    $region33: #{tpu_custom_call.1} parent=1 // pred_fallthru
      _
    // Predicated region
    $region34: #{tpu_custom_call.1} parent=1 // pred_check
      _
    $region35: #{tpu_custom_call.1} parent=1 // pred_check_branch
      %191 = sbr.rel (0) target = $region37
    $region36: #{tpu_custom_call.1} parent=1 // pred_region
      %192 = dma.done [#allocation4], 384
    $region37: #{tpu_custom_call.1} parent=1 // pred_fallthru
      _
    %193 = vsyncpa [#allocation3], 1
    %194 = vsyncpa [#allocation6], 1
    %195 = vsyncpa [#allocation4], 1

</llo_original>
